<compile_context>
chip_gen: v7x
topology: tpu7x:2x2x1
jax: 0.10.0
libtpu: 0.0.40
codegen_flags: <defaults>
</compile_context>

<pallas_src>
import jax
import jax.numpy as jnp
from jax.experimental import pallas as pl
from jax.experimental.pallas import tpu as pltpu

_LANE = 128       # lane width (last dim)
_SUBLANE = 8      # sublane width for 32-bit dtypes (second-to-last dim)


def _flatten_copy_kernel(x_ref, o_ref):
    # x_ref / o_ref are matching (TR, TC) VMEM tiles; pure identity copy.
    o_ref[...] = x_ref[...]


def _sublane_step(itemsize):
    """Dtype-aware sublane granularity: 8 (f32), 16 (bf16), 32 (int8/fp8)."""
    return _SUBLANE * max(1, 4 // int(itemsize))


def _vmem_budget_bytes():
    """Per-tile VMEM budget derived from the actual chip.

    budget = capacity/32 -> ~4 MiB/tile on 128 MiB parts (v5e/v6e), ~2 MiB on
    v7x (64 MiB).  The fallback assumes the *smallest* VMEM (v7x) so stale
    128 MiB-era assumptions never leak through.
    """
    try:
        cap = int(pltpu.get_tpu_info().vmem_capacity_bytes)
    except Exception:
        cap = 64 << 20  # conservative: v7x-sized VMEM
    return max(cap // 32, 1 << 20)


def _choose_flat_tiling(N, itemsize, budget):
    """Re-tile the flat N-element stream as (R, C) with (TR, C) blocks.

    Returns (R, C, TR) or None when N is not a multiple of 128 (ragged case).
    C is a multiple of 128, TR a multiple of the dtype-aware sublane step (or
    the full R when R is tiny), and TR*C*itemsize <= budget.
    """
    if N % _LANE != 0:
        return None
    sub = _sublane_step(itemsize)

    # Prefer a wide lane dim, but keep enough rows to tile along sublanes.
    C = _LANE
    for cand in (1024, 512, 256, 128):
        if N % cand == 0 and N // cand >= sub:
            C = cand
            break
    R = N // C

    if R <= sub:
        # Tiny input: one full-height, lane-dense block (full-dim rule OK).
        return R, C, R

    row_bytes = C * itemsize
    max_rows = max(budget // row_bytes, sub)
    TR = max(min((max_rows // sub) * sub, (R // sub) * sub), sub)
    # Guarantee >=2 row blocks so v7x can shard the copy across both TCs.
    if TR >= R:
        TR = max(((R - 1) // sub) * sub, sub)
    return R, C, TR


def _choose_2d_tiling(B, D, itemsize, budget):
    """Fallback tiling over the logical (B, D) view when B*D % 128 != 0.

    Both the lane and sublane tile dims are bounded by the VMEM budget; ragged
    tails are handled by the cdiv grid with masked partial blocks.
    """
    sub = _sublane_step(itemsize)

    if D <= _LANE:
        td = D  # full-dim lane block satisfies the tiling rule
    else:
        budget_lanes = max((budget // (sub * itemsize)) // _LANE, 1) * _LANE
        td = max(min((D // _LANE) * _LANE, budget_lanes), _LANE)

    if B <= sub:
        tb = B  # full-dim sublane block
    else:
        max_rows = max(budget // (td * itemsize), sub)
        tb = max(min((max_rows // sub) * sub, (B // sub) * sub), sub)
    return tb, td


def _identity_copy_2d(x2d, block, itemsize):
    """Tiled identity copy of a 2-D array with lane/sublane-dense blocks."""
    R, C = x2d.shape
    tb, tc = block
    grid = (pl.cdiv(R, tb), pl.cdiv(C, tc))

    tile_bytes = tb * tc * itemsize
    # Double-buffered input + output = 4 live tile buffers, plus headroom.
    # tile <= capacity/32 keeps this well under the 32 MiB scoped default on
    # every part (and under v7x's 64 MiB physical VMEM).
    vmem_limit = int(max(4 * tile_bytes + (2 << 20), 16 << 20))

    return pl.pallas_call(
        _flatten_copy_kernel,
        out_shape=jax.ShapeDtypeStruct((R, C), x2d.dtype),
        grid=grid,
        in_specs=[pl.BlockSpec((tb, tc), lambda i, j: (i, j))],
        out_specs=pl.BlockSpec((tb, tc), lambda i, j: (i, j)),
        compiler_params=pltpu.CompilerParams(
            dimension_semantics=("parallel", "parallel"),
            vmem_limit_bytes=vmem_limit,
        ),
        cost_estimate=pl.CostEstimate(
            flops=0,
            transcendentals=0,
            bytes_accessed=2 * R * C * itemsize,
        ),
    )(x2d)


def flatten_pallas(x, materialize=False):
    """Equivalent of PyTorch `x.view(x.size(0), -1)`.

    Default (materialize=False): metadata-only reshape — zero HBM traffic.
    materialize=True: tiled Pallas identity copy into a fresh (B, D) buffer.
    """
    B = x.shape[0]
    D = 1
    for s in x.shape[1:]:
        D *= s

    if not materialize:
        # Flatten is a view; no kernel and no data movement required.
        return jnp.reshape(x, (B, D))

    itemsize = jnp.dtype(x.dtype).itemsize
    budget = _vmem_budget_bytes()
    N = B * D

    flat = _choose_flat_tiling(N, itemsize, budget)
    if flat is not None:
        # Tile the flat element stream independently of the logical (B, D)
        # split: lane/sublane-dense blocks regardless of how small B is.
        R, C, TR = flat
        y = _identity_copy_2d(jnp.reshape(x, (R, C)), (TR, C), itemsize)
        return jnp.reshape(y, (B, D))

    # Ragged total (N % 128 != 0): tile the (B, D) view with budget-capped,
    # 128-multiple lane blocks and a masked ragged tail.
    tb, td = _choose_2d_tiling(B, D, itemsize, budget)
    return _identity_copy_2d(jnp.reshape(x, (B, D)), (tb, td), itemsize)


if __name__ == "__main__":
    key = jax.random.PRNGKey(0)
    # Small NCHW input consistent with how Flatten is used after convs.
    B, C, H, W = 2, 4, 16, 16
    x = jax.random.normal(key, (B, C, H, W), dtype=jnp.float32)
    y_ref = jnp.reshape(x, (B, C * H * W))

    # Default path: metadata-only reshape (recommended; zero HBM traffic).
    y_view = jax.block_until_ready(flatten_pallas(x))
    assert y_view.shape == (B, C * H * W) and y_view.dtype == x.dtype
    assert bool(jnp.array_equal(y_view, y_ref))

    # Materialized path: lane/sublane-dense Pallas identity copy.
    y_copy = jax.block_until_ready(flatten_pallas(x, materialize=True))
    assert y_copy.shape == (B, C * H * W) and y_copy.dtype == x.dtype
    assert bool(jnp.array_equal(y_copy, y_ref))

    # Ragged fallback path (B*D not a multiple of 128).
    x2 = jax.random.normal(jax.random.PRNGKey(0), (3, 5, 7), dtype=jnp.float32)
    y2 = jax.block_until_ready(flatten_pallas(x2, materialize=True))
    assert bool(jnp.array_equal(y2, jnp.reshape(x2, (3, 35))))

    print("KERNEL_OK")
</pallas_src>

<mosaic_0001>
module attributes {stable_mosaic.version = 11 : i64} {
  func.func @_flatten_copy_kernel(%arg0: i32, %arg1: i32, %arg2: memref<8x256xf32, #tpu.memory_space<vmem>>, %arg3: memref<8x256xf32, #tpu.memory_space<vmem>>) attributes {dimension_semantics = [#tpu.dimension_semantics<parallel>, #tpu.dimension_semantics<parallel>], iteration_bounds = array<i64: 1, 1>, scalar_prefetch = 0 : i64, scratch_operands = 0 : i64, tpu.core_type = #tpu.core_type<tc>, window_params = [{transform_indices = @transform_0, window_bounds = array<i64: 8, 256>}, {transform_indices = @transform_1, window_bounds = array<i64: 8, 256>}]} {
    %c0 = arith.constant 0 : index
    %c0_0 = arith.constant 0 : index
    %0 = vector.load %arg2[%c0, %c0_0] : memref<8x256xf32, #tpu.memory_space<vmem>>, vector<8x256xf32>
    %c0_1 = arith.constant 0 : index
    %c0_2 = arith.constant 0 : index
    %1 = vector.load %arg3[%c0_1, %c0_2] : memref<8x256xf32, #tpu.memory_space<vmem>>, vector<8x256xf32>
    tpu.vector_store %arg3[%c0_1, %c0_2], %0 {strides = array<i32>} : memref<8x256xf32, #tpu.memory_space<vmem>>, vector<8x256xf32>,
    return
  }
  func.func @transform_0(%arg0: i32, %arg1: i32) -> (i32, i32) {
    %c0_i32 = arith.constant 0 : i32
    return %arg0, %arg1 : i32, i32
  }
  func.func @transform_1(%arg0: i32, %arg1: i32) -> (i32, i32) {
    %c0_i32 = arith.constant 0 : i32
    return %arg0, %arg1 : i32, i32
  }
}

</mosaic_0001>

<llo_original>
// kernel: tpu_custom_call.1
$region0: #{tpu_custom_call.1}
  #allocation0 [shape = 'u32[]', space=smem, size = 0x4, offset = 0x4, fixed_abs, tag = 'smem constant byte address 0x4 - core index']
  #allocation1 [shape = 'u32[144,128]{1,0:T(1,128)}', space=vmem, size = 0x12000, scoped, tag = 'internal scratch']
  %s0 = inlined_call_operand.hbm [shape: f32[8,256], index: 0, kind: input, shape index: {}]
  %s1 = inlined_call_operand.hbm [shape: f32[8,256], index: 1, kind: output, shape index: {}]
  %s2 = sld [smem:[#allocation0]]
  $region18: #{tpu_custom_call.1} parent=0
    _
  %s4 = ssub.s32 1, %s2
  %s5 = scalar_select 0, %s4, %s2
  $region1: #{tpu_custom_call.1} parent=0
    #allocation2 [shape = 'u8[8192]{0}', space=vmem, size = 0x2000, scoped, tag = 'input window, operand 0, single buffered']
    #allocation3 [shape = 's32[1]{0}', space=sflag, size = 0x4, scoped, tag = 'scoped memory for tpu_custom_call.1']
    #allocation4 [shape = 's32[1]{0}', space=sflag, size = 0x4, scoped, tag = 'scoped memory for tpu_custom_call.1']
    #allocation5 [shape = 'u8[8192]{0}', space=vmem, size = 0x2000, scoped, tag = 'output window, operand 0, single buffered']
    %6 = vsyncpa [#allocation3], 0
    %7 = vsyncpa [#allocation4], 0
    // Predicated region
    $region2: #{tpu_custom_call.1} parent=1 // pred_check
      _
    $region3: #{tpu_custom_call.1} parent=1 // pred_check_branch
      %9 = sbr.rel (0) target = $region5
    $region4: #{tpu_custom_call.1} parent=1 // pred_region
      %s11 = ssub.s32 256, 256
      %12 = vsyncadd [#allocation3], %s11
      %s14 = sshll.u32 [#allocation2], 4
      %s15 = int_to_ptr.vmem [resolvable:$true] %s14
      %17 = dma.hbm_to_vmem [thread:$0]  %s0, 256, %s15, [#allocation3]
    $region5: #{tpu_custom_call.1} parent=1 // pred_fallthru
      _
    // Predicated region
    $region6: #{tpu_custom_call.1} parent=1 // pred_check
      _
    $region7: #{tpu_custom_call.1} parent=1 // pred_check_branch
      %19 = sbr.rel (0) target = $region9
    $region8: #{tpu_custom_call.1} parent=1 // pred_region
      %20 = dma.done [#allocation3], 256
    $region9: #{tpu_custom_call.1} parent=1 // pred_fallthru
      _
    %v21 = vld [vmem:[#allocation2] sm:$0xff]
    %v22 = vld [vmem:[#allocation2 + $0x8] sm:$0xff]
    %23 = vst [vmem:[#allocation5] sm:$0xff] %v21
    %24 = vst [vmem:[#allocation5 + $0x8] sm:$0xff] %v22
    // Predicated region
    $region10: #{tpu_custom_call.1} parent=1 // pred_check
      _
    $region11: #{tpu_custom_call.1} parent=1 // pred_check_branch
      %26 = sbr.rel (0) target = $region13
    $region12: #{tpu_custom_call.1} parent=1 // pred_region
      %s28 = ssub.s32 256, 256
      %29 = vsyncadd [#allocation4], %s28
      %s31 = sshll.u32 [#allocation5], 4
      %s32 = int_to_ptr.vmem [resolvable:$true] %s31
      %34 = dma.vmem_to_hbm [thread:$0]  %s32, 256, %s1, [#allocation4]
    $region13: #{tpu_custom_call.1} parent=1 // pred_fallthru
      _
    // Predicated region
    $region14: #{tpu_custom_call.1} parent=1 // pred_check
      _
    $region15: #{tpu_custom_call.1} parent=1 // pred_check_branch
      %36 = sbr.rel (0) target = $region17
    $region16: #{tpu_custom_call.1} parent=1 // pred_region
      %37 = dma.done [#allocation4], 256
    $region17: #{tpu_custom_call.1} parent=1 // pred_fallthru
      _
    %38 = vsyncpa [#allocation3], 1
    %39 = vsyncpa [#allocation4], 1

</llo_original>
